<compile_context>
chip_gen: v7x
topology: tpu7x:2x2x1
jax: 0.10.0
libtpu: 0.0.40
codegen_flags: <defaults>
</compile_context>

<pallas_src>
import jax
import jax.numpy as jnp
from jax.experimental import pallas as pl
from jax.experimental.pallas import tpu as pltpu


def _make_label_smoothing_kernel(smoothing):
    def kernel(x_ref, o_ref):
        x = x_ref[...]
        delta = (x == 0.0).astype(x.dtype) - (x == 1.0).astype(x.dtype)
        o_ref[...] = x + smoothing * delta
    return kernel


def tool_label_smoothing(target_vectors, smoothing=0.05):
    """Elementwise label smoothing. Accepts any shape/float dtype."""
    orig_shape = target_vectors.shape
    dtype = target_vectors.dtype
    itemsize = jnp.dtype(dtype).itemsize

    x = target_vectors.reshape(-1)
    total = x.shape[0]

    # --- choose a lane-dense slab width W (multiple of 128) -----------------
    W = 2048
    while W > 128 and total < W * 8:
        W //= 2

    # rows needed, rounded up to a multiple of 8 (sublane tiling)
    rows = -(-total // W)
    rows = -(-rows // 8) * 8

    # --- choose block rows: target ~2 MiB per block --------------------------
    target_block_bytes = 2 * 1024 * 1024
    rows_per_block = max(8, (target_block_bytes // (W * itemsize)) // 8 * 8)
    tile_r = min(rows_per_block, rows)
    # Keep >=2 grid steps when the array is big enough (v7x has 2 TensorCores).
    if tile_r == rows and rows >= 16:
        tile_r = max(8, (rows // 2) // 8 * 8)

    rows_final = -(-rows // tile_r) * tile_r
    total_pad = rows_final * W
    if total_pad != total:
        x = jnp.pad(x, (0, total_pad - total))  # pad values sliced off below
    x2 = x.reshape(rows_final, W)

    grid = (rows_final // tile_r,)
    kernel = _make_label_smoothing_kernel(smoothing)

    out2 = pl.pallas_call(
        kernel,
        out_shape=jax.ShapeDtypeStruct((rows_final, W), dtype),
        grid_spec=pltpu.PrefetchScalarGridSpec(
            num_scalar_prefetch=0,
            grid=grid,
            in_specs=[pl.BlockSpec((tile_r, W), lambda i: (i, 0))],
            out_specs=pl.BlockSpec((tile_r, W), lambda i: (i, 0)),
        ),
        compiler_params=pltpu.CompilerParams(
            dimension_semantics=("parallel",),
        ),
    )(x2)

    return out2.reshape(-1)[:total].reshape(orig_shape)


def _reference(x, smoothing=0.05):
    plus = (x == 0.0).astype(x.dtype)
    minus = (x == 1.0).astype(x.dtype)
    return x + smoothing * plus - smoothing * minus


if __name__ == "__main__":
    key = jax.random.PRNGKey(0)

    # --- test 1: (8,128)-aligned one-hot-ish targets -------------------------
    N, C = 16, 256
    k1, k2, k3 = jax.random.split(key, 3)
    onehot = jax.nn.one_hot(jax.random.randint(k1, (N,), 0, C), C, dtype=jnp.float32)
    noise = jax.random.uniform(k2, (N, C), dtype=jnp.float32)
    mix_mask = (jax.random.uniform(k3, (N, C)) < 0.1).astype(jnp.float32)
    x = onehot * (1.0 - mix_mask) + noise * mix_mask  # mostly exact 0s/1s

    out = jax.block_until_ready(tool_label_smoothing(x, smoothing=0.05))
    ref = _reference(x, 0.05)
    assert out.shape == x.shape and out.dtype == x.dtype
    assert jnp.allclose(out, ref, atol=1e-6), "mismatch vs reference (aligned case)"

    # --- test 2: odd shape to exercise the pad/slice path --------------------
    y = jnp.where(jax.random.uniform(key, (7, 33)) < 0.5, 0.0, 1.0).astype(jnp.float32)
    out_y = jax.block_until_ready(tool_label_smoothing(y, smoothing=0.05))
    assert jnp.allclose(out_y, _reference(y, 0.05), atol=1e-6), "mismatch (odd shape)"

    print("KERNEL_OK")
</pallas_src>

<mosaic_0001>
module attributes {stable_mosaic.version = 11 : i64} {
  func.func @kernel(%arg0: i32, %arg1: memref<8x512xf32, #tpu.memory_space<vmem>>, %arg2: memref<8x512xf32, #tpu.memory_space<vmem>>) attributes {dimension_semantics = [#tpu.dimension_semantics<parallel>], iteration_bounds = array<i64: 1>, scalar_prefetch = 0 : i64, scratch_operands = 0 : i64, tpu.core_type = #tpu.core_type<tc>, window_params = [{transform_indices = @transform_0, window_bounds = array<i64: 8, 512>}, {transform_indices = @transform_1, window_bounds = array<i64: 8, 512>}]} {
    %c0 = arith.constant 0 : index
    %c0_0 = arith.constant 0 : index
    %0 = vector.load %arg1[%c0, %c0_0] : memref<8x512xf32, #tpu.memory_space<vmem>>, vector<8x512xf32>
    %cst = arith.constant 0.000000e+00 : f32
    %1 = vector.broadcast %cst : f32 to vector<8x512xf32>
    %2 = arith.cmpf oeq, %0, %1 : vector<8x512xf32>
    %3 = arith.extui %2 : vector<8x512xi1> to vector<8x512xi32>
    %4 = arith.sitofp %3 : vector<8x512xi32> to vector<8x512xf32>
    %cst_1 = arith.constant 1.000000e+00 : f32
    %5 = vector.broadcast %cst_1 : f32 to vector<8x512xf32>
    %6 = arith.cmpf oeq, %0, %5 : vector<8x512xf32>
    %7 = arith.extui %6 : vector<8x512xi1> to vector<8x512xi32>
    %8 = arith.sitofp %7 : vector<8x512xi32> to vector<8x512xf32>
    %9 = arith.subf %4, %8 : vector<8x512xf32>
    %cst_2 = arith.constant 5.000000e-02 : f32
    %10 = vector.broadcast %cst_2 : f32 to vector<8x512xf32>
    %11 = arith.mulf %10, %9 : vector<8x512xf32>
    %12 = arith.addf %0, %11 : vector<8x512xf32>
    %c0_3 = arith.constant 0 : index
    %c0_4 = arith.constant 0 : index
    %13 = vector.load %arg2[%c0_3, %c0_4] : memref<8x512xf32, #tpu.memory_space<vmem>>, vector<8x512xf32>
    tpu.vector_store %arg2[%c0_3, %c0_4], %12 {strides = array<i32>} : memref<8x512xf32, #tpu.memory_space<vmem>>, vector<8x512xf32>,
    return
  }
  func.func @transform_0(%arg0: i32) -> (i32, i32) {
    %c0_i32 = arith.constant 0 : i32
    %c0_i32_0 = arith.constant 0 : i32
    return %arg0, %c0_i32 : i32, i32
  }
  func.func @transform_1(%arg0: i32) -> (i32, i32) {
    %c0_i32 = arith.constant 0 : i32
    %c0_i32_0 = arith.constant 0 : i32
    return %arg0, %c0_i32 : i32, i32
  }
}

</mosaic_0001>

<llo_original>
// kernel: tpu_custom_call.1
$region0: #{tpu_custom_call.1}
  #allocation0 [shape = 'u32[]', space=smem, size = 0x4, offset = 0x4, fixed_abs, tag = 'smem constant byte address 0x4 - core index']
  #allocation1 [shape = 'u32[144,128]{1,0:T(1,128)}', space=vmem, size = 0x12000, scoped, tag = 'internal scratch']
  %s0 = inlined_call_operand.hbm [shape: f32[8,512], index: 0, kind: input, shape index: {}]
  %s1 = inlined_call_operand.hbm [shape: f32[8,512], index: 1, kind: output, shape index: {}]
  %s2 = sld [smem:[#allocation0]]
  $region18: #{tpu_custom_call.1} parent=0
    _
  %s4 = ssub.s32 1, %s2
  %s5 = scalar_select 0, %s4, %s2
  $region1: #{tpu_custom_call.1} parent=0
    #allocation2 [shape = 'u8[16384]{0}', space=vmem, size = 0x4000, scoped, tag = 'input window, operand 0, single buffered']
    #allocation3 [shape = 's32[1]{0}', space=sflag, size = 0x4, scoped, tag = 'scoped memory for tpu_custom_call.1']
    #allocation4 [shape = 's32[1]{0}', space=sflag, size = 0x4, scoped, tag = 'scoped memory for tpu_custom_call.1']
    #allocation5 [shape = 'u8[16384]{0}', space=vmem, size = 0x4000, scoped, tag = 'output window, operand 0, single buffered']
    %6 = vsyncpa [#allocation3], 0
    %7 = vsyncpa [#allocation4], 0
    // Predicated region
    $region2: #{tpu_custom_call.1} parent=1 // pred_check
      _
    $region3: #{tpu_custom_call.1} parent=1 // pred_check_branch
      %9 = sbr.rel (0) target = $region5
    $region4: #{tpu_custom_call.1} parent=1 // pred_region
      %s11 = ssub.s32 512, 512
      %12 = vsyncadd [#allocation3], %s11
      %s14 = sshll.u32 [#allocation2], 4
      %s15 = int_to_ptr.vmem [resolvable:$true] %s14
      %17 = dma.hbm_to_vmem [thread:$0]  %s0, 512, %s15, [#allocation3]
    $region5: #{tpu_custom_call.1} parent=1 // pred_fallthru
      _
    // Predicated region
    $region6: #{tpu_custom_call.1} parent=1 // pred_check
      _
    $region7: #{tpu_custom_call.1} parent=1 // pred_check_branch
      %19 = sbr.rel (0) target = $region9
    $region8: #{tpu_custom_call.1} parent=1 // pred_region
      %20 = dma.done [#allocation3], 512
    $region9: #{tpu_custom_call.1} parent=1 // pred_fallthru
      _
    %v21 = vld [vmem:[#allocation2] sm:$0xff]
    %v22 = vld [vmem:[#allocation2 + $0x8] sm:$0xff]
    %v23 = vld [vmem:[#allocation2 + $0x10] sm:$0xff]
    %v24 = vld [vmem:[#allocation2 + $0x18] sm:$0xff]
    %vm25 = vcmp.eq.f32.partialorder %v21, 0.0
    %vm26 = vcmp.eq.f32.partialorder %v22, 0.0
    %vm27 = vcmp.eq.f32.partialorder %v23, 0.0
    %vm28 = vcmp.eq.f32.partialorder %v24, 0.0
    %v29 = vsel %vm25, 1, 0
    %v30 = vsel %vm26, 1, 0
    %v31 = vsel %vm27, 1, 0
    %v32 = vsel %vm28, 1, 0
    %v33 = vcvt.s32.f32 %v29
    %v34 = vcvt.s32.f32 %v30
    %v35 = vcvt.s32.f32 %v31
    %v36 = vcvt.s32.f32 %v32
    %vm37 = vcmp.eq.f32.partialorder %v21, 1.0
    %vm38 = vcmp.eq.f32.partialorder %v22, 1.0
    %vm39 = vcmp.eq.f32.partialorder %v23, 1.0
    %vm40 = vcmp.eq.f32.partialorder %v24, 1.0
    %v41 = vsel %vm37, 1, 0
    %v42 = vsel %vm38, 1, 0
    %v43 = vsel %vm39, 1, 0
    %v44 = vsel %vm40, 1, 0
    %v45 = vcvt.s32.f32 %v41
    %v46 = vcvt.s32.f32 %v42
    %v47 = vcvt.s32.f32 %v43
    %v48 = vcvt.s32.f32 %v44
    %v49 = vsub.f32 %v33, %v45
    %v50 = vsub.f32 %v34, %v46
    %v51 = vsub.f32 %v35, %v47
    %v52 = vsub.f32 %v36, %v48
    %v53 = vmul.f32 %v49, 0.05
    %v54 = vmul.f32 %v50, 0.05
    %v55 = vmul.f32 %v51, 0.05
    %v56 = vmul.f32 %v52, 0.05
    %v57 = vadd.f32 %v21, %v53
    %v58 = vadd.f32 %v22, %v54
    %v59 = vadd.f32 %v23, %v55
    %v60 = vadd.f32 %v24, %v56
    %61 = vst [vmem:[#allocation5] sm:$0xff] %v57
    %62 = vst [vmem:[#allocation5 + $0x8] sm:$0xff] %v58
    %63 = vst [vmem:[#allocation5 + $0x10] sm:$0xff] %v59
    %64 = vst [vmem:[#allocation5 + $0x18] sm:$0xff] %v60
    // Predicated region
    $region10: #{tpu_custom_call.1} parent=1 // pred_check
      _
    $region11: #{tpu_custom_call.1} parent=1 // pred_check_branch
      %66 = sbr.rel (0) target = $region13
    $region12: #{tpu_custom_call.1} parent=1 // pred_region
      %s68 = ssub.s32 512, 512
      %69 = vsyncadd [#allocation4], %s68
      %s71 = sshll.u32 [#allocation5], 4
      %s72 = int_to_ptr.vmem [resolvable:$true] %s71
      %74 = dma.vmem_to_hbm [thread:$0]  %s72, 512, %s1, [#allocation4]
    $region13: #{tpu_custom_call.1} parent=1 // pred_fallthru
      _
    // Predicated region
    $region14: #{tpu_custom_call.1} parent=1 // pred_check
      _
    $region15: #{tpu_custom_call.1} parent=1 // pred_check_branch
      %76 = sbr.rel (0) target = $region17
    $region16: #{tpu_custom_call.1} parent=1 // pred_region
      %77 = dma.done [#allocation4], 512
    $region17: #{tpu_custom_call.1} parent=1 // pred_fallthru
      _
    %78 = vsyncpa [#allocation3], 1
    %79 = vsyncpa [#allocation4], 1

</llo_original>
